<compile_context>
chip_gen: v5e
topology: v5e:2x2
jax: 0.10.0
libtpu: 0.0.40
codegen_flags: <defaults>
</compile_context>

<pallas_src>
import functools

import jax
import jax.numpy as jnp
from jax import lax
from jax.experimental import pallas as pl
from jax.experimental.pallas import tpu as pltpu


def _feature_transform_kernel(x_ref, w_ref, h_ref):
    """H_tile = X_tile @ W^T, contracting dim_in of both operands directly
    (no .T inside the kernel -> no XLU transpose / extra VMEM copy)."""
    h_ref[...] = lax.dot_general(
        x_ref[...],
        w_ref[...],
        dimension_numbers=(((1,), (1,)), ((), ())),
        preferred_element_type=jnp.float32,
    ).astype(h_ref.dtype)


def _aggregate_kernel(a_ref, h_ref, o_ref, acc_ref, *, tk):
    """acc[i] += A[i, k] @ H[k]; H is fully resident in VMEM."""
    k = pl.program_id(1)

    @pl.when(k == 0)
    def _():
        acc_ref[...] = jnp.zeros_like(acc_ref)

    row = pl.multiple_of(k * tk, tk)
    h_tile = h_ref[pl.ds(row, tk), :]        # slice of resident f32 H (no DMA)
    acc_ref[...] += jnp.dot(a_ref[...], h_tile, preferred_element_type=jnp.float32)

    @pl.when(k == pl.num_programs(1) - 1)
    def _():
        o_ref[...] = acc_ref[...].astype(o_ref.dtype)


def gnn_layer(x, adjacency, weight, *, tm=128, tk=512, tm_h=128):
    """x: [N, dim_in], adjacency: [N, N], weight: [dim_out, dim_in] -> [N, dim_out]"""
    N, dim_in = x.shape
    dim_out = weight.shape[0]
    assert adjacency.shape == (N, N)

    tm = min(tm, N)
    tk = min(tk, N)
    tm_h = min(tm_h, N)
    assert N % tm == 0 and N % tk == 0 and N % tm_h == 0

    # ---- Stage 1: H = X @ W^T (computed once, never recomputed) -------------
    # dim_in / dim_out are small for this model (<= a few hundred), so the full
    # weight and full feature width fit in one block; weight's index map is
    # constant so it is DMA'd once.
    h = pl.pallas_call(
        _feature_transform_kernel,
        out_shape=jax.ShapeDtypeStruct((N, dim_out), jnp.float32),
        grid_spec=pltpu.PrefetchScalarGridSpec(
            num_scalar_prefetch=0,
            grid=(N // tm_h,),
            in_specs=[
                pl.BlockSpec((tm_h, dim_in), lambda i: (i, 0)),
                pl.BlockSpec((dim_out, dim_in), lambda i: (0, 0)),
            ],
            out_specs=pl.BlockSpec((tm_h, dim_out), lambda i: (i, 0)),
        ),
        compiler_params=pltpu.CompilerParams(
            dimension_semantics=("parallel",)
        ),
    )(x, weight)

    # ---- Stage 2: out = A @ H ------------------------------------------------
    # Adjacency is streamed in its native dtype (single 4 B/elem HBM read, no
    # extra wrapper cast pass).  H stays f32 and fully VMEM-resident (constant
    # index map -> fetched once); the k-tile of H is sliced in-kernel, so
    # adjacency is the only per-step HBM fetch.
    kernel = functools.partial(_aggregate_kernel, tk=tk)

    out = pl.pallas_call(
        kernel,
        out_shape=jax.ShapeDtypeStruct((N, dim_out), x.dtype),
        grid_spec=pltpu.PrefetchScalarGridSpec(
            num_scalar_prefetch=0,
            grid=(N // tm, N // tk),
            in_specs=[
                # adjacency tile A[i, k]
                pl.BlockSpec((tm, tk), lambda i, k: (i, k)),
                # full H, resident across the whole grid (fetched once)
                pl.BlockSpec((N, dim_out), lambda i, k: (0, 0)),
            ],
            out_specs=pl.BlockSpec((tm, dim_out), lambda i, k: (i, 0)),
            scratch_shapes=[pltpu.VMEM((tm, dim_out), jnp.float32)],
        ),
        compiler_params=pltpu.CompilerParams(
            dimension_semantics=("parallel", "arbitrary")
        ),
    )(adjacency, h)
    return out


if __name__ == "__main__":
    # Small synthetic problem consistent with the module:
    # N nodes, dim_in input features, dim_out output features.
    N, dim_in, dim_out = 256, 128, 128

    key = jax.random.PRNGKey(0)
    kx, ka, kw = jax.random.split(key, 3)

    x = jax.random.normal(kx, (N, dim_in), dtype=jnp.float32)

    # Dense adjacency: random 0/1 matrix (what to_dense_adj produces).
    adjacency = (jax.random.uniform(ka, (N, N)) < 0.05).astype(jnp.float32)

    # Deterministic Linear weight, PyTorch layout [dim_out, dim_in],
    # uniform(-1/sqrt(dim_in), 1/sqrt(dim_in)) like torch.nn.Linear default.
    bound = 1.0 / jnp.sqrt(jnp.float32(dim_in))
    weight = jax.random.uniform(
        kw, (dim_out, dim_in), minval=-bound, maxval=bound, dtype=jnp.float32
    )

    out = gnn_layer(x, adjacency, weight)
    out = jax.block_until_ready(out)

    # Pure-JAX reference for correctness.
    ref = adjacency @ (x @ weight.T)
    assert out.shape == (N, dim_out)
    assert jnp.allclose(out, ref, atol=1e-3, rtol=1e-3)

    print("KERNEL_OK")
</pallas_src>

<mosaic_0001>
module attributes {stable_mosaic.version = 11 : i64} {
  func.func @_feature_transform_kernel(%arg0: i32, %arg1: memref<128x128xf32, #tpu.memory_space<vmem>>, %arg2: memref<128x128xf32, #tpu.memory_space<vmem>>, %arg3: memref<128x128xf32, #tpu.memory_space<vmem>>) attributes {dimension_semantics = [#tpu.dimension_semantics<parallel>], iteration_bounds = array<i64: 2>, scalar_prefetch = 0 : i64, scratch_operands = 0 : i64, tpu.core_type = #tpu.core_type<tc>, window_params = [{transform_indices = @transform_0, window_bounds = array<i64: 128, 128>}, {pipeline_mode = #tpu.pipeline_mode<synchronous>, transform_indices = @transform_1, window_bounds = array<i64: 128, 128>}, {transform_indices = @transform_2, window_bounds = array<i64: 128, 128>}]} {
    %c0 = arith.constant 0 : index
    %c0_0 = arith.constant 0 : index
    %0 = vector.load %arg1[%c0, %c0_0] : memref<128x128xf32, #tpu.memory_space<vmem>>, vector<128x128xf32>
    %c0_1 = arith.constant 0 : index
    %c0_2 = arith.constant 0 : index
    %1 = vector.load %arg2[%c0_1, %c0_2] : memref<128x128xf32, #tpu.memory_space<vmem>>, vector<128x128xf32>
    %cst = arith.constant dense<0.000000e+00> : vector<128x128xf32>
    %2 = tpu.matmul %0, %1, %cst {dimension_numbers = #tpu.dot_dimension_numbers<[1], [1], [0], [0], [0, 0, 1, 0], [], []>} : vector<128x128xf32>, vector<128x128xf32>, vector<128x128xf32> -> vector<128x128xf32>
    %c0_3 = arith.constant 0 : index
    %c0_4 = arith.constant 0 : index
    %3 = vector.load %arg3[%c0_3, %c0_4] : memref<128x128xf32, #tpu.memory_space<vmem>>, vector<128x128xf32>
    tpu.vector_store %arg3[%c0_3, %c0_4], %2 {strides = array<i32>} : memref<128x128xf32, #tpu.memory_space<vmem>>, vector<128x128xf32>,
    return
  }
  func.func @transform_0(%arg0: i32) -> (i32, i32) {
    %c0_i32 = arith.constant 0 : i32
    %c0_i32_0 = arith.constant 0 : i32
    return %arg0, %c0_i32 : i32, i32
  }
  func.func @transform_1(%arg0: i32) -> (i32, i32) {
    %c0_i32 = arith.constant 0 : i32
    %c0_i32_0 = arith.constant 0 : i32
    %c0_i32_1 = arith.constant 0 : i32
    return %c0_i32, %c0_i32_0 : i32, i32
  }
  func.func @transform_2(%arg0: i32) -> (i32, i32) {
    %c0_i32 = arith.constant 0 : i32
    %c0_i32_0 = arith.constant 0 : i32
    return %arg0, %c0_i32 : i32, i32
  }
}

</mosaic_0001>

<llo_original>
// kernel: tpu_custom_call.1
$region0: #{tpu_custom_call.1}
  #allocation0 [shape = 'u32[]', space=smem, size = 0x4, offset = 0x4, fixed_abs, tag = 'smem constant byte address 0x4 - core index']
  #allocation1 [shape = 'u32[72,128]{1,0:T(1,128)}', space=vmem, size = 0x9000, scoped, tag = 'internal scratch']
  %s0 = inlined_call_operand.hbm [shape: f32[256,128], index: 0, kind: input, shape index: {}]
  %s1 = inlined_call_operand.hbm [shape: f32[128,128], index: 1, kind: input, shape index: {}]
  %s2 = inlined_call_operand.hbm [shape: f32[256,128], index: 2, kind: output, shape index: {}]
  %s3 = sld [smem:[#allocation0]]
  $region49: #{tpu_custom_call.1} parent=0
    _
  %s5 = ssub.s32 1, %s3
  %s6 = scalar_select 0, %s5, %s3
  $region1: #{tpu_custom_call.1} parent=0
    #allocation2 [shape = 'u8[131072]{0}', space=vmem, size = 0x20000, scoped, tag = 'input window, operand 0']
    #allocation3 [shape = 's32[2]{0}', space=sflag, size = 0x8, scoped, tag = 'scoped memory for tpu_custom_call.1']
    #allocation4 [shape = 's32[2]{0}', space=sflag, size = 0x8, scoped, tag = 'scoped memory for tpu_custom_call.1']
    #allocation5 [shape = 'u8[65536]{0}', space=vmem, size = 0x10000, scoped, tag = 'input window, operand 1, single buffered']
    #allocation6 [shape = 's32[1]{0}', space=sflag, size = 0x4, scoped, tag = 'scoped memory for tpu_custom_call.1']
    #allocation7 [shape = 'u8[131072]{0}', space=vmem, size = 0x20000, scoped, tag = 'output window, operand 0']
    %7 = vsyncpa [#allocation3], 0
    %s8 = scalar_lea.sflag [#allocation3], 1
    %9 = vsyncpa %s8, 0
    %10 = vsyncpa [#allocation6], 0
    %11 = vsyncpa [#allocation4], 0
    %s12 = scalar_lea.sflag [#allocation4], 1
    %13 = vsyncpa %s12, 0
    loop: start=0, step=1, limit=4
    $region2: #{tpu_custom_call.1} parent=1 // loop_pre_header
      _
    $region3: #{tpu_custom_call.1} parent=1 // loop_header
      %s15 = sphi 0, %s19
      %p16 = scmp.ge.s32.totalorder %s15, 4
      %s25 = sphi 0, %s27
      %s28 = sphi 0, %s25
      %s29 = sphi 0, %s28
      %s45 = sphi 0, %s29
      %s49 = sphi 0, %s49
      %s51 = sphi 0, %s49
      %s52 = sphi 0, %s51
      %s66 = sphi 0, %s52
      %s72 = sphi 0, %s74
      %s75 = sphi 0, %s72
      %s76 = sphi 0, %s75
      %s92 = sphi 0, %s76
    $region4: #{tpu_custom_call.1} parent=1 // loop_header_branch
      %18 = sbr.rel (%p16) target = $region8
    $region5: #{tpu_custom_call.1} parent=1 // loop_body
      %s20 = ssub.s32 %s15, 1
      %s21 = ssub.s32 %s15, 2
      %s22 = sadd.s32 %s15, 1
      %s23 = ssub.s32 %s15, %s22
      %p24 = scmp.eq.s32.totalorder %s23, 0
      %s26 = sadd.s32 %s25, 1
      %s27 = scalar_select %p24, %s25, %s26
      %p30 = pneg %p24
      %p31 = scmp.eq.s32.totalorder %s15, 1
      %p32 = por %p30, %p31
      %p33 = scmp.ne.s32.totalorder %s25, %s28
      %p34 = scmp.eq.s32.totalorder %s15, 0
      %p35 = por %p33, %p34
      %p36 = scmp.ne.s32.totalorder %s25, %s28
      %p37 = scmp.eq.s32.totalorder %s20, 1
      %p38 = por %p36, %p37
      %p39 = scmp.ne.s32.totalorder %s28, %s29
      %p40 = scmp.eq.s32.totalorder %s20, 0
      %p41 = por %p39, %p40
      %p42 = scmp.ne.s32.totalorder %s28, %s29
      %p43 = scmp.eq.s32.totalorder %s21, 1
      %p44 = por %p42, %p43
      %p46 = scmp.ne.s32.totalorder %s29, %s45
      %p47 = scmp.eq.s32.totalorder %s21, 0
      %p48 = por %p46, %p47
      %s50 = sadd.s32 %s49, 1
      %p53 = scmp.eq.s32.totalorder %s15, 1
      %p54 = scmp.ne.s32.totalorder %s49, %s51
      %p55 = scmp.eq.s32.totalorder %s15, 0
      %p56 = por %p54, %p55
      %p57 = scmp.ne.s32.totalorder %s49, %s51
      %p58 = scmp.eq.s32.totalorder %s20, 1
      %p59 = por %p57, %p58
      %p60 = scmp.ne.s32.totalorder %s51, %s52
      %p61 = scmp.eq.s32.totalorder %s20, 0
      %p62 = por %p60, %p61
      %p63 = scmp.ne.s32.totalorder %s51, %s52
      %p64 = scmp.eq.s32.totalorder %s21, 1
      %p65 = por %p63, %p64
      %p67 = scmp.ne.s32.totalorder %s52, %s66
      %p68 = scmp.eq.s32.totalorder %s21, 0
      %p69 = por %p67, %p68
      %s70 = ssub.s32 %s15, %s22
      %p71 = scmp.eq.s32.totalorder %s70, 0
      %s73 = sadd.s32 %s72, 1
      %s74 = scalar_select %p71, %s72, %s73
      %p77 = pneg %p71
      %p78 = scmp.eq.s32.totalorder %s15, 1
      %p79 = por %p77, %p78
      %p80 = scmp.ne.s32.totalorder %s72, %s75
      %p81 = scmp.eq.s32.totalorder %s15, 0
      %p82 = por %p80, %p81
      %p83 = scmp.ne.s32.totalorder %s72, %s75
      %p84 = scmp.eq.s32.totalorder %s20, 1
      %p85 = por %p83, %p84
      %p86 = scmp.ne.s32.totalorder %s75, %s76
      %p87 = scmp.eq.s32.totalorder %s20, 0
      %p88 = por %p86, %p87
      %p89 = scmp.ne.s32.totalorder %s75, %s76
      %p90 = scmp.eq.s32.totalorder %s21, 1
      %p91 = por %p89, %p90
      %p93 = scmp.ne.s32.totalorder %s76, %s92
      %p94 = scmp.eq.s32.totalorder %s21, 0
      %p95 = por %p93, %p94
      %p96 = scmp.le.s32.totalorder 1, %s15
      %p97 = scmp.lt.s32.totalorder %s15, 3
      %p98 = pnand %p96, %p97
      %p99 = pneg %p98
      // Predicated region
      $region9: #{tpu_custom_call.1} parent=5 // pred_check
        _
      $region10: #{tpu_custom_call.1} parent=5 // pred_check_branch
        %101 = sbr.rel (%p98) target = $region12
      $region11: #{tpu_custom_call.1} parent=5 // pred_region
        %s102 = ssub.s32 %s15, 1
        // Predicated region
        $region13: #{tpu_custom_call.1} parent=11 // pred_check
          %p103 = pneg %p62
        $region14: #{tpu_custom_call.1} parent=11 // pred_check_branch
          %105 = sbr.rel (%p103) target = $region16
        $region15: #{tpu_custom_call.1} parent=11 // pred_region
          %107 = vsyncadd [#allocation6], 0
          %s108 = sshll.u32 %s1, 4
          %s109 = int_to_ptr.hbm [resolvable:$true] %s108
          %s110 = sshll.u32 [#allocation5], 4
          %s111 = int_to_ptr.vmem [resolvable:$true] %s110
          %116 = dma.hbm_to_vmem [thread:$0]  %s109, 2048, %s111, [#allocation6], 128, 128, 8
        $region16: #{tpu_custom_call.1} parent=11 // pred_fallthru
          _
      $region12: #{tpu_custom_call.1} parent=5 // pred_fallthru
        _
      %p117 = scmp.lt.s32.totalorder %s15, 2
      // Predicated region
      $region17: #{tpu_custom_call.1} parent=5 // pred_check
        %p118 = pneg %p117
      $region18: #{tpu_custom_call.1} parent=5 // pred_check_branch
        %120 = sbr.rel (%p118) target = $region20
      $region19: #{tpu_custom_call.1} parent=5 // pred_region
        // Predicated region
        $region21: #{tpu_custom_call.1} parent=19 // pred_check
          %p121 = pneg %p35
        $region22: #{tpu_custom_call.1} parent=19 // pred_check_branch
          %123 = sbr.rel (%p121) target = $region24
        $region23: #{tpu_custom_call.1} parent=19 // pred_region
          %s124 = sand.u32 %s25, 1
          %s125 = scalar_lea.sflag [#allocation3], %s124
          %s126 = sand.u32 %s25, 1
          %s127 = smul.addr %s126, 128
          %s128 = scalar_lea.vmem [#allocation2], %s127
          %s129 = smul.u32 16, %s15
          %131 = vsyncadd %s125, 0
          %s132 = smul.addr %s129, 8
          %s133 = scalar_lea.hbm %s0, %s132
          %s134 = sshll.u32 %s133, 4
          %s135 = int_to_ptr.hbm [resolvable:$true] %s134
          %s136 = sshll.u32 %s128, 4
          %s137 = int_to_ptr.vmem [resolvable:$true] %s136
          %142 = dma.hbm_to_vmem [thread:$0]  %s135, 2048, %s137, %s125, 128, 128, 8
        $region24: #{tpu_custom_call.1} parent=19 // pred_fallthru
          _
      $region20: #{tpu_custom_call.1} parent=5 // pred_fallthru
        _
      %p143 = scmp.le.s32.totalorder 1, %s15
      %p144 = scmp.lt.s32.totalorder %s15, 3
      %p145 = pnand %p143, %p144
      %p146 = pneg %p145
      // Predicated region
      $region25: #{tpu_custom_call.1} parent=5 // pred_check
        _
      $region26: #{tpu_custom_call.1} parent=5 // pred_check_branch
        %148 = sbr.rel (%p145) target = $region28
      $region27: #{tpu_custom_call.1} parent=5 // pred_region
        %s149 = ssub.s32 %s15, 1
        %s150 = sand.u32 %s28, 1
        %s151 = scalar_lea.sflag [#allocation3], %s150
        %s152 = sand.u32 %s28, 1
        %s153 = smul.addr %s152, 128
        %s154 = scalar_lea.vmem [#allocation2], %s153
        // Predicated region
        $region29: #{tpu_custom_call.1} parent=27 // pred_check
          %p155 = pneg %p41
        $region30: #{tpu_custom_call.1} parent=27 // pred_check_branch
          %157 = sbr.rel (%p155) target = $region32
        $region31: #{tpu_custom_call.1} parent=27 // pred_region
          %159 = dma.done %s151, 2048
        $region32: #{tpu_custom_call.1} parent=27 // pred_fallthru
          _
        // Predicated region
        $region33: #{tpu_custom_call.1} parent=27 // pred_check
          %p160 = pneg %p62
        $region34: #{tpu_custom_call.1} parent=27 // pred_check_branch
          %162 = sbr.rel (%p160) target = $region36
        $region35: #{tpu_custom_call.1} parent=27 // pred_region
          %164 = dma.done [#allocation6], 2048
        $region36: #{tpu_custom_call.1} parent=27 // pred_fallthru
          _
        %s165 = sand.u32 %s28, 1
        %s166 = scalar_lea.sflag [#allocation3], %s165
        %s167 = sand.u32 %s28, 1
        %s168 = smul.addr %s167, 128
        %s169 = scalar_lea.vmem [#allocation2], %s168
        %p170 = pneg %p41
        %p171 = pneg %p38
        %p172 = pneg %p62
        %p173 = pneg %p59
        %p174 = pneg %p88
        %p175 = pneg %p85
        %s176 = sand.u32 %s75, 1
        %s177 = scalar_lea.sflag [#allocation4], %s176
        %s178 = sand.u32 %s75, 1
        %s179 = smul.addr %s178, 128
        %s180 = scalar_lea.vmem [#allocation7], %s179
        %s181 = smul.u32 16, %s20
        %s182 = smul.u32 16, %s20
        %v183 = vld [vmem:[%s154] sm:$0xff]
        %v184 = vld [vmem:[%s154 + $0x8] sm:$0xff]
        %v185 = vld [vmem:[%s154 + $0x10] sm:$0xff]
        %v186 = vld [vmem:[%s154 + $0x18] sm:$0xff]
        %v187 = vld [vmem:[%s154 + $0x20] sm:$0xff]
        %v188 = vld [vmem:[%s154 + $0x28] sm:$0xff]
        %v189 = vld [vmem:[%s154 + $0x30] sm:$0xff]
        %v190 = vld [vmem:[%s154 + $0x38] sm:$0xff]
        %v191 = vld [vmem:[%s154 + $0x40] sm:$0xff]
        %v192 = vld [vmem:[%s154 + $0x48] sm:$0xff]
        %v193 = vld [vmem:[%s154 + $0x50] sm:$0xff]
        %v194 = vld [vmem:[%s154 + $0x58] sm:$0xff]
        %v195 = vld [vmem:[%s154 + $0x60] sm:$0xff]
        %v196 = vld [vmem:[%s154 + $0x68] sm:$0xff]
        %v197 = vld [vmem:[%s154 + $0x70] sm:$0xff]
        %v198 = vld [vmem:[%s154 + $0x78] sm:$0xff]
        %v199 = vld [vmem:[#allocation5] sm:$0xff]
        %v200 = vld [vmem:[#allocation5 + $0x8] sm:$0xff]
        %v201 = vld [vmem:[#allocation5 + $0x10] sm:$0xff]
        %v202 = vld [vmem:[#allocation5 + $0x18] sm:$0xff]
        %v203 = vld [vmem:[#allocation5 + $0x20] sm:$0xff]
        %v204 = vld [vmem:[#allocation5 + $0x28] sm:$0xff]
        %v205 = vld [vmem:[#allocation5 + $0x30] sm:$0xff]
        %v206 = vld [vmem:[#allocation5 + $0x38] sm:$0xff]
        %v207 = vld [vmem:[#allocation5 + $0x40] sm:$0xff]
        %v208 = vld [vmem:[#allocation5 + $0x48] sm:$0xff]
        %v209 = vld [vmem:[#allocation5 + $0x50] sm:$0xff]
        %v210 = vld [vmem:[#allocation5 + $0x58] sm:$0xff]
        %v211 = vld [vmem:[#allocation5 + $0x60] sm:$0xff]
        %v212 = vld [vmem:[#allocation5 + $0x68] sm:$0xff]
        %v213 = vld [vmem:[#allocation5 + $0x70] sm:$0xff]
        %v214 = vld [vmem:[#allocation5 + $0x78] sm:$0xff]
        %215 = vmatpush.xpose.msra.mxu0 %v214
        %216 = vmatpush.xpose.msra.mxu0 %v213
        %217 = vmatpush.xpose.msra.mxu0 %v212
        %218 = vmatpush.xpose.msra.mxu0 %v211
        %219 = vmatpush.xpose.msra.mxu0 %v210
        %220 = vmatpush.xpose.msra.mxu0 %v209
        %221 = vmatpush.xpose.msra.mxu0 %v208
        %222 = vmatpush.xpose.msra.mxu0 %v207
        %223 = vmatpush.xpose.msra.mxu0 %v206
        %224 = vmatpush.xpose.msra.mxu0 %v205
        %225 = vmatpush.xpose.msra.mxu0 %v204
        %226 = vmatpush.xpose.msra.mxu0 %v203
        %227 = vmatpush.xpose.msra.mxu0 %v202
        %228 = vmatpush.xpose.msra.mxu0 %v201
        %229 = vmatpush.xpose.msra.mxu0 %v200
        %230 = vmatpush.xpose.msra.mxu0 %v199
        %231 = vmatmul.f32.gmra.mxu0 %v183
        %v232 = vpop.f32.mrf.mxu0
        %v233 = vadd.f32 0.0, %v232
        %234 = vmatmul.f32.gmra.mxu0 %v184
        %v235 = vpop.f32.mrf.mxu0
        %v236 = vadd.f32 0.0, %v235
        %237 = vmatmul.f32.gmra.mxu0 %v185
        %v238 = vpop.f32.mrf.mxu0
        %v239 = vadd.f32 0.0, %v238
        %240 = vmatmul.f32.gmra.mxu0 %v186
        %v241 = vpop.f32.mrf.mxu0
        %v242 = vadd.f32 0.0, %v241
        %243 = vmatmul.f32.gmra.mxu0 %v187
        %v244 = vpop.f32.mrf.mxu0
        %v245 = vadd.f32 0.0, %v244
        %246 = vmatmul.f32.gmra.mxu0 %v188
        %v247 = vpop.f32.mrf.mxu0
        %v248 = vadd.f32 0.0, %v247
        %249 = vmatmul.f32.gmra.mxu0 %v189
        %v250 = vpop.f32.mrf.mxu0
        %v251 = vadd.f32 0.0, %v250
        %252 = vmatmul.f32.gmra.mxu0 %v190
        %v253 = vpop.f32.mrf.mxu0
        %v254 = vadd.f32 0.0, %v253
        %255 = vmatmul.f32.gmra.mxu0 %v191
        %v256 = vpop.f32.mrf.mxu0
        %v257 = vadd.f32 0.0, %v256
        %258 = vmatmul.f32.gmra.mxu0 %v192
        %v259 = vpop.f32.mrf.mxu0
        %v260 = vadd.f32 0.0, %v259
        %261 = vmatmul.f32.gmra.mxu0 %v193
        %v262 = vpop.f32.mrf.mxu0
        %v263 = vadd.f32 0.0, %v262
        %264 = vmatmul.f32.gmra.mxu0 %v194
        %v265 = vpop.f32.mrf.mxu0
        %v266 = vadd.f32 0.0, %v265
        %267 = vmatmul.f32.gmra.mxu0 %v195
        %v268 = vpop.f32.mrf.mxu0
        %v269 = vadd.f32 0.0, %v268
        %270 = vmatmul.f32.gmra.mxu0 %v196
        %v271 = vpop.f32.mrf.mxu0
        %v272 = vadd.f32 0.0, %v271
        %273 = vmatmul.f32.gmra.mxu0 %v197
        %v274 = vpop.f32.mrf.mxu0
        %v275 = vadd.f32 0.0, %v274
        %276 = vmatmul.f32.gmra.mxu0 %v198
        %v277 = vpop.f32.mrf.mxu0
        %v278 = vadd.f32 0.0, %v277
        %279 = vdwg.mxu0
        %280 = vst [vmem:[%s180] sm:$0xff] %v233
        %281 = vst [vmem:[%s180 + $0x8] sm:$0xff] %v236
        %282 = vst [vmem:[%s180 + $0x10] sm:$0xff] %v239
        %283 = vst [vmem:[%s180 + $0x18] sm:$0xff] %v242
        %284 = vst [vmem:[%s180 + $0x20] sm:$0xff] %v245
        %285 = vst [vmem:[%s180 + $0x28] sm:$0xff] %v248
        %286 = vst [vmem:[%s180 + $0x30] sm:$0xff] %v251
        %287 = vst [vmem:[%s180 + $0x38] sm:$0xff] %v254
        %288 = vst [vmem:[%s180 + $0x40] sm:$0xff] %v257
        %289 = vst [vmem:[%s180 + $0x48] sm:$0xff] %v260
        %290 = vst [vmem:[%s180 + $0x50] sm:$0xff] %v263
        %291 = vst [vmem:[%s180 + $0x58] sm:$0xff] %v266
        %292 = vst [vmem:[%s180 + $0x60] sm:$0xff] %v269
        %293 = vst [vmem:[%s180 + $0x68] sm:$0xff] %v272
        %294 = vst [vmem:[%s180 + $0x70] sm:$0xff] %v275
        %295 = vst [vmem:[%s180 + $0x78] sm:$0xff] %v278
        %s296 = sand.u32 %s75, 1
        %s297 = scalar_lea.sflag [#allocation4], %s296
        %s298 = sand.u32 %s75, 1
        %s299 = smul.addr %s298, 128
        %s300 = scalar_lea.vmem [#allocation7], %s299
        // Predicated region
        $region37: #{tpu_custom_call.1} parent=27 // pred_check
          %p301 = pneg %p85
        $region38: #{tpu_custom_call.1} parent=27 // pred_check_branch
          %303 = sbr.rel (%p301) target = $region40
        $region39: #{tpu_custom_call.1} parent=27 // pred_region
          %s304 = smul.u32 16, %s20
          %306 = vsyncadd %s297, 0
          %s307 = smul.addr %s304, 8
          %s308 = scalar_lea.hbm %s2, %s307
          %s309 = sshll.u32 %s300, 4
          %s310 = int_to_ptr.vmem [resolvable:$true] %s309
          %s311 = sshll.u32 %s308, 4
          %s312 = int_to_ptr.hbm [resolvable:$true] %s311
          %317 = dma.vmem_to_hbm [thread:$0]  %s310, 2048, %s312, %s297, 128, 128, 8
        $region40: #{tpu_custom_call.1} parent=27 // pred_fallthru
          _
      $region28: #{tpu_custom_call.1} parent=5 // pred_fallthru
        _
      %p318 = scmp.le.s32.totalorder 2, %s15
      // Predicated region
      $region41: #{tpu_custom_call.1} parent=5 // pred_check
        %p319 = pneg %p318
      $region42: #{tpu_custom_call.1} parent=5 // pred_check_branch
        %321 = sbr.rel (%p319) target = $region44
      $region43: #{tpu_custom_call.1} parent=5 // pred_region
        %s322 = ssub.s32 %s15, 2
        // Predicated region
        $region45: #{tpu_custom_call.1} parent=43 // pred_check
          %p323 = pneg %p91
        $region46: #{tpu_custom_call.1} parent=43 // pred_check_branch
          %325 = sbr.rel (%p323) target = $region48
        $region47: #{tpu_custom_call.1} parent=43 // pred_region
          %s326 = sand.u32 %s76, 1
          %s327 = scalar_lea.sflag [#allocation4], %s326
          %s328 = sand.u32 %s76, 1
          %s329 = smul.addr %s328, 128
          %s330 = scalar_lea.vmem [#allocation7], %s329
          %332 = dma.done %s327, 2048
        $region48: #{tpu_custom_call.1} parent=43 // pred_fallthru
          _
      $region44: #{tpu_custom_call.1} parent=5 // pred_fallthru
        _
    $region6: #{tpu_custom_call.1} parent=1 // loop_footer
      %s19 = sadd.s32 1, %s15
    $region7: #{tpu_custom_call.1} parent=1 // loop_footer_branch
      %14 = sbr.rel target = $region3
    $region8: #{tpu_custom_call.1} parent=1 // loop_exit
      _
    %333 = vsyncpa [#allocation3], 1
    %s334 = scalar_lea.sflag [#allocation3], 1
    %335 = vsyncpa %s334, 1
    %336 = vsyncpa [#allocation6], 1
    %337 = vsyncpa [#allocation4], 1
    %s338 = scalar_lea.sflag [#allocation4], 1
    %339 = vsyncpa %s338, 1

</llo_original>
